<compile_context>
chip_gen: v5e
topology: v5e:2x2
jax: 0.10.0
libtpu: 0.0.40
codegen_flags: <defaults>
</compile_context>

<pallas_src>
import functools

import jax
import jax.numpy as jnp
from jax.experimental import pallas as pl
from jax.experimental.pallas import tpu as pltpu

LN_EPS = 1e-5  # torch nn.LayerNorm default


def _round_up(n, m):
    return ((n + m - 1) // m) * m


def security_nn_kernel(x_ref, p_ref, out_ref, *, F, H, compute_grade):
    """x: [blk, F]; p: packed f32 slab [R, 128]; out: [8, blk] or [1, blk]."""
    xdt = x_ref.dtype
    f32 = jnp.float32
    blk = x_ref.shape[0]
    r0 = F + 128  # first parameter row after the two weight blocks

    def mm(a, w):
        # Default path (f32 x) does no casting at all; bf16 x runs the MXU in
        # bf16 with f32 accumulation (weights cast in-kernel, slab is tiny).
        if a.dtype != xdt:
            a = a.astype(xdt)
        if w.dtype != xdt:
            w = w.astype(xdt)
        return jnp.dot(a, w, preferred_element_type=f32)

    x = x_ref[...]

    if compute_grade:
        # --- packed parameters (full 128-lane rows; no lane sub-slices) ---
        W1 = p_ref[0:F, :]            # [F, 128]  = w1 || wg1
        W2 = p_ref[F:r0, :]           # [128,128] block-diag: w2 (0:H,0:H), wg2 (H:2H, H:H+5)
        b1c = p_ref[r0 + 0:r0 + 1, :]     # b1 || bg1
        g1 = p_ref[r0 + 1:r0 + 2, :]      # gamma1 (lanes 0:H), 0 elsewhere
        be1 = p_ref[r0 + 2:r0 + 3, :]     # beta1
        b2c = p_ref[r0 + 3:r0 + 4, :]     # b2 (0:H) || bg2 (H:H+5)
        g2 = p_ref[r0 + 4:r0 + 5, :]
        be2 = p_ref[r0 + 5:r0 + 6, :]
        b3 = p_ref[r0 + 6:r0 + 7, 0:1]    # [1,1]
        SEL = p_ref[r0 + 8:r0 + 16, :]    # [8,128]; row0 = w3, rows1..5 pick grade lanes

        lane = jax.lax.broadcasted_iota(jnp.int32, (blk, 128), 1)
        head = lane < H  # lanes belonging to the score path

        # --- fused first layer (both heads): one 128-wide MXU matmul ---
        h0 = mm(x, W1) + b1c                                  # [blk, 128] f32

        # masked LayerNorm over lanes 0:H (score path); identity on grade lanes
        hm = jnp.where(head, h0, 0.0)
        mu = jnp.sum(hm, axis=-1, keepdims=True) * (1.0 / H)
        ms = jnp.sum(hm * hm, axis=-1, keepdims=True) * (1.0 / H)
        inv = jax.lax.rsqrt(ms - mu * mu + LN_EPS)
        h0 = jnp.where(head, (h0 - mu) * inv * g1 + be1, h0)
        r = jnp.maximum(h0, 0.0)  # ReLU: correct for both heads

        # --- fused second stage: one [blk,128] @ [128,128] matmul ---
        # lanes 0:H -> h1 @ w2 + b2 ; lanes H:H+5 -> grade logits (gh @ wg2 + bg2)
        h2 = mm(r, W2) + b2c                                  # [blk, 128] f32

        # masked LayerNorm + ReLU on score lanes only; grade logits pass through
        hm2 = jnp.where(head, h2, 0.0)
        mu2 = jnp.sum(hm2, axis=-1, keepdims=True) * (1.0 / H)
        ms2 = jnp.sum(hm2 * hm2, axis=-1, keepdims=True) * (1.0 / H)
        inv2 = jax.lax.rsqrt(ms2 - mu2 * mu2 + LN_EPS)
        h2 = jnp.where(head, jnp.maximum((h2 - mu2) * inv2 * g2 + be2, 0.0), h2)

        # --- lane-dense transposed output via a small selector matmul (A @ B^T) ---
        # row 0 = h2 . w3 (score logit), rows 1..5 = grade logits, rows 6..7 = 0
        outT = jax.lax.dot_general(SEL, h2, (((1,), (1,)), ((), ())),
                                   preferred_element_type=f32)    # [8, blk]
        score_row = jax.nn.sigmoid(outT[0:1, :] + b3) * 100.0     # [1, blk]
        row = jax.lax.broadcasted_iota(jnp.int32, (8, blk), 0)
        out_ref[...] = jnp.where(row == 0, score_row, outT).astype(out_ref.dtype)
    else:
        # Score-only build: grade half of the network is never computed.
        W1 = p_ref[0:F, 0:H]
        W2 = p_ref[F:F + H, 0:H]
        b1 = p_ref[r0 + 0:r0 + 1, 0:H]
        g1 = p_ref[r0 + 1:r0 + 2, 0:H]
        be1 = p_ref[r0 + 2:r0 + 3, 0:H]
        b2 = p_ref[r0 + 3:r0 + 4, 0:H]
        g2 = p_ref[r0 + 4:r0 + 5, 0:H]
        be2 = p_ref[r0 + 5:r0 + 6, 0:H]
        b3 = p_ref[r0 + 6:r0 + 7, 0:1]
        SEL = p_ref[r0 + 8:r0 + 16, 0:H]   # row0 = w3, other rows are zero here

        h0 = mm(x, W1) + b1                                   # [blk, H]
        mu = jnp.mean(h0, axis=-1, keepdims=True)
        ms = jnp.mean(h0 * h0, axis=-1, keepdims=True)
        h0 = (h0 - mu) * jax.lax.rsqrt(ms - mu * mu + LN_EPS) * g1 + be1
        r = jnp.maximum(h0, 0.0)

        h2 = mm(r, W2) + b2                                   # [blk, H]
        mu2 = jnp.mean(h2, axis=-1, keepdims=True)
        ms2 = jnp.mean(h2 * h2, axis=-1, keepdims=True)
        h2 = jnp.maximum((h2 - mu2) * jax.lax.rsqrt(ms2 - mu2 * mu2 + LN_EPS)
                         * g2 + be2, 0.0)

        outT = jax.lax.dot_general(SEL, h2, (((1,), (1,)), ((), ())),
                                   preferred_element_type=f32)    # [8, blk]
        out_ref[...] = (jax.nn.sigmoid(outT[0:1, :] + b3) * 100.0
                        ).astype(out_ref.dtype)                   # [1, blk]


def init_params(key, input_size, hidden_size=64):
    """Deterministic torch-style init (U(-1/sqrt(fan_in), 1/sqrt(fan_in)))."""
    def linear(k, fan_in, fan_out):
        kw, kb = jax.random.split(k)
        bound = 1.0 / jnp.sqrt(fan_in)
        w = jax.random.uniform(kw, (fan_in, fan_out), jnp.float32, -bound, bound)
        b = jax.random.uniform(kb, (1, fan_out), jnp.float32, -bound, bound)
        return w, b

    keys = jax.random.split(key, 5)
    w1, b1 = linear(keys[0], input_size, hidden_size)
    w2, b2 = linear(keys[1], hidden_size, hidden_size)
    w3, b3 = linear(keys[2], hidden_size, 1)
    wg1, bg1 = linear(keys[3], input_size, hidden_size)
    wg2, bg2 = linear(keys[4], hidden_size, 5)
    ones = jnp.ones((1, hidden_size), jnp.float32)
    zeros = jnp.zeros((1, hidden_size), jnp.float32)
    return dict(w1=w1, b1=b1, g1=ones, be1=zeros,
                w2=w2, b2=b2, g2=ones, be2=zeros,
                w3=w3, b3=b3,
                wg1=wg1, bg1=bg1, wg2=wg2, bg2=bg2)


def pack_params(p, input_size, hidden_size=64):
    """Pack all parameters into one lane-dense f32 slab [R, 128].

    Layout:
      rows 0:F          w1 (lanes 0:H) | wg1 (lanes H:2H)
      rows F:F+128      block-diagonal second stage: w2 (rows 0:H, lanes 0:H),
                        wg2 (rows H:2H, lanes H:H+5)
      rows r0..r0+6     b1||bg1, gamma1, beta1, b2||bg2, gamma2, beta2, b3
      rows r0+8..r0+15  selector: row0 = w3, rows 1..5 one-hot grade lanes
    """
    F, H = input_size, hidden_size
    assert H % 8 == 0 and 2 * H <= 128, "packing assumes hidden_size <= 64"
    r0 = F + 128
    R = _round_up(r0 + 16, 8)
    slab = jnp.zeros((R, 128), jnp.float32)
    # first layer (both heads)
    slab = slab.at[0:F, 0:H].set(p["w1"])
    slab = slab.at[0:F, H:2 * H].set(p["wg1"])
    # block-diagonal fused second stage
    slab = slab.at[F:F + H, 0:H].set(p["w2"])
    slab = slab.at[F + H:F + 2 * H, H:H + 5].set(p["wg2"])
    # biases / LayerNorm params
    slab = slab.at[r0 + 0, 0:H].set(p["b1"].reshape(H))
    slab = slab.at[r0 + 0, H:2 * H].set(p["bg1"].reshape(H))
    slab = slab.at[r0 + 1, 0:H].set(p["g1"].reshape(H))
    slab = slab.at[r0 + 2, 0:H].set(p["be1"].reshape(H))
    slab = slab.at[r0 + 3, 0:H].set(p["b2"].reshape(H))
    slab = slab.at[r0 + 3, H:H + 5].set(p["bg2"].reshape(5))
    slab = slab.at[r0 + 4, 0:H].set(p["g2"].reshape(H))
    slab = slab.at[r0 + 5, 0:H].set(p["be2"].reshape(H))
    slab = slab.at[r0 + 6, 0].set(p["b3"][0, 0])
    # selector rows (produce the transposed, lane-dense output on the MXU)
    slab = slab.at[r0 + 8, 0:H].set(p["w3"].reshape(H))
    for c in range(1, 6):
        slab = slab.at[r0 + 8 + c, H + c - 1].set(1.0)
    return slab


def _pick_block_b(B, sub, block_b):
    if block_b is not None:
        block_b = _round_up(block_b, sub)
        if _round_up(B, block_b) > block_b:        # multi-tile => lane-dense out
            block_b = _round_up(block_b, 128)
        return block_b
    if B <= 256:
        # single tile: padding-free; the [*, block_b] output equals the full dim
        return _round_up(max(B, 1), sub)
    # >= 2 tiles (both v7x TCs busy, DMA overlapped everywhere), <= 2048 rows.
    tiles = max(2, -(-B // 2048))
    return _round_up(-(-B // tiles), 128)


def security_nn_forward(x, slab, *, hidden_size=64, predict_grade=False,
                        block_b=None):
    B, F = x.shape
    H = hidden_size
    assert H % 8 == 0 and 2 * H <= 128
    n_rows = 8 if predict_grade else 1

    # Never cast x here: f32 stays f32 (v5e-safe); natively-bf16 inputs keep
    # their dtype and the kernel runs its matmuls in bf16.
    sub = 16 if x.dtype == jnp.bfloat16 else 8
    block_b = _pick_block_b(B, sub, block_b)
    Bp = _round_up(B, block_b)
    if Bp != B:
        x = jnp.pad(x, ((0, Bp - B), (0, 0)))

    R = slab.shape[0]
    kernel = functools.partial(security_nn_kernel, F=F, H=H,
                               compute_grade=bool(predict_grade))

    out = pl.pallas_call(
        kernel,
        out_shape=jax.ShapeDtypeStruct((n_rows, Bp), jnp.float32),
        grid=(Bp // block_b,),
        in_specs=[
            pl.BlockSpec((block_b, F), lambda i: (i, 0)),   # batch-tiled input
            pl.BlockSpec((R, 128), lambda i: (0, 0)),       # one packed weight slab
        ],
        # transposed, lane-dense output: last dim is the batch tile
        out_specs=pl.BlockSpec((n_rows, block_b), lambda i: (0, i)),
        compiler_params=pltpu.CompilerParams(
            dimension_semantics=("parallel",),
            vmem_limit_bytes=32 * 1024 * 1024),
    )(x, slab)

    score = out[0:1, :B].T                      # [B, 1]
    if predict_grade:
        return score, out[1:6, :B].T            # [B, 5]
    return score


def reference_forward(x, p, predict_grade=False):
    """Pure-JAX reference (mirrors the PyTorch module in eval mode)."""
    def ln(h, g, b):
        mu = jnp.mean(h, -1, keepdims=True)
        var = jnp.mean((h - mu) ** 2, -1, keepdims=True)
        return (h - mu) / jnp.sqrt(var + LN_EPS) * g + b

    h = x @ p["w1"] + p["b1"]
    h = jnp.maximum(ln(h, p["g1"], p["be1"]), 0.0)
    h = h @ p["w2"] + p["b2"]
    h = jnp.maximum(ln(h, p["g2"], p["be2"]), 0.0)
    score = jax.nn.sigmoid(h @ p["w3"] + p["b3"]) * 100.0
    if predict_grade:
        g = jnp.maximum(x @ p["wg1"] + p["bg1"], 0.0)
        return score, g @ p["wg2"] + p["bg2"]
    return score


if __name__ == "__main__":
    INPUT_SIZE = 16
    HIDDEN_SIZE = 64

    key = jax.random.PRNGKey(0)
    kx, kp, kx2 = jax.random.split(key, 3)
    raw = init_params(kp, INPUT_SIZE, HIDDEN_SIZE)
    slab = pack_params(raw, INPUT_SIZE, HIDDEN_SIZE)

    fwd_both = jax.jit(functools.partial(
        security_nn_forward, hidden_size=HIDDEN_SIZE, predict_grade=True))
    fwd_score = jax.jit(functools.partial(
        security_nn_forward, hidden_size=HIDDEN_SIZE, predict_grade=False))

    # --- small batch: single tile (grid = 1) ---
    x = jax.random.normal(kx, (64, INPUT_SIZE), dtype=jnp.float32)
    score, grade_logits = fwd_both(x, slab)
    score_only = fwd_score(x, slab)
    jax.block_until_ready((score, grade_logits, score_only))

    ref_score, ref_grade = reference_forward(x, raw, predict_grade=True)
    assert score.shape == (64, 1)
    assert grade_logits.shape == (64, 5)
    assert score_only.shape == (64, 1)
    assert bool(jnp.all(jnp.isfinite(score)))
    assert bool(jnp.all((score >= 0.0) & (score <= 100.0)))
    assert bool(jnp.allclose(score, ref_score, rtol=1e-2, atol=1e-2))
    assert bool(jnp.allclose(grade_logits, ref_grade, rtol=1e-2, atol=1e-2))
    assert bool(jnp.allclose(score_only, ref_score, rtol=1e-2, atol=1e-2))

    # --- larger batch: grid >= 2 (both v7x TCs busy; pipelined DMA elsewhere) ---
    x2 = jax.random.normal(kx2, (512, INPUT_SIZE), dtype=jnp.float32)
    s2, g2 = fwd_both(x2, slab)
    s2_only = fwd_score(x2, slab)
    jax.block_until_ready((s2, g2, s2_only))
    r2s, r2g = reference_forward(x2, raw, predict_grade=True)
    assert s2.shape == (512, 1) and g2.shape == (512, 5)
    assert bool(jnp.allclose(s2, r2s, rtol=1e-2, atol=1e-2))
    assert bool(jnp.allclose(g2, r2g, rtol=1e-2, atol=1e-2))
    assert bool(jnp.allclose(s2_only, r2s, rtol=1e-2, atol=1e-2))

    print("KERNEL_OK")
</pallas_src>

<mosaic_0001>
module attributes {stable_mosaic.version = 11 : i64} {
  func.func @security_nn_kernel(%arg0: i32, %arg1: memref<64x16xf32, #tpu.memory_space<vmem>>, %arg2: memref<160x128xf32, #tpu.memory_space<vmem>>, %arg3: memref<8x64xf32, #tpu.memory_space<vmem>>) attributes {dimension_semantics = [#tpu.dimension_semantics<parallel>], iteration_bounds = array<i64: 1>, scalar_prefetch = 0 : i64, scratch_operands = 0 : i64, tpu.core_type = #tpu.core_type<tc>, window_params = [{transform_indices = @transform_0, window_bounds = array<i64: 64, 16>}, {pipeline_mode = #tpu.pipeline_mode<synchronous>, transform_indices = @transform_1, window_bounds = array<i64: 160, 128>}, {transform_indices = @transform_2, window_bounds = array<i64: 8, 64>}]} {
    %c0 = arith.constant 0 : index
    %c0_0 = arith.constant 0 : index
    %0 = vector.load %arg1[%c0, %c0_0] : memref<64x16xf32, #tpu.memory_space<vmem>>, vector<64x16xf32>
    %c0_1 = arith.constant 0 : index
    %c0_2 = arith.constant 0 : index
    %1 = vector.load %arg2[%c0_1, %c0_2] : memref<160x128xf32, #tpu.memory_space<vmem>>, vector<16x128xf32>
    %c16 = arith.constant 16 : index
    %c0_3 = arith.constant 0 : index
    %2 = vector.load %arg2[%c16, %c0_3] : memref<160x128xf32, #tpu.memory_space<vmem>>, vector<128x128xf32>
    %c144 = arith.constant 144 : index
    %c0_4 = arith.constant 0 : index
    %3 = vector.load %arg2[%c144, %c0_4] : memref<160x128xf32, #tpu.memory_space<vmem>>, vector<1x128xf32>
    %c145 = arith.constant 145 : index
    %c0_5 = arith.constant 0 : index
    %4 = vector.load %arg2[%c145, %c0_5] : memref<160x128xf32, #tpu.memory_space<vmem>>, vector<1x128xf32>
    %c146 = arith.constant 146 : index
    %c0_6 = arith.constant 0 : index
    %5 = vector.load %arg2[%c146, %c0_6] : memref<160x128xf32, #tpu.memory_space<vmem>>, vector<1x128xf32>
    %c147 = arith.constant 147 : index
    %c0_7 = arith.constant 0 : index
    %6 = vector.load %arg2[%c147, %c0_7] : memref<160x128xf32, #tpu.memory_space<vmem>>, vector<1x128xf32>
    %c148 = arith.constant 148 : index
    %c0_8 = arith.constant 0 : index
    %7 = vector.load %arg2[%c148, %c0_8] : memref<160x128xf32, #tpu.memory_space<vmem>>, vector<1x128xf32>
    %c149 = arith.constant 149 : index
    %c0_9 = arith.constant 0 : index
    %8 = vector.load %arg2[%c149, %c0_9] : memref<160x128xf32, #tpu.memory_space<vmem>>, vector<1x128xf32>
    %c150 = arith.constant 150 : index
    %c0_10 = arith.constant 0 : index
    %9 = vector.load %arg2[%c150, %c0_10] : memref<160x128xf32, #tpu.memory_space<vmem>>, vector<1x1xf32>
    %c152 = arith.constant 152 : index
    %c0_11 = arith.constant 0 : index
    %10 = vector.load %arg2[%c152, %c0_11] : memref<160x128xf32, #tpu.memory_space<vmem>>, vector<8x128xf32>
    %11 = tpu.iota {dimensions = array<i32: 1>} : vector<64x128xi32>
    %c64_i32 = arith.constant 64 : i32
    %12 = vector.broadcast %c64_i32 : i32 to vector<64x128xi32>
    %13 = arith.cmpi slt, %11, %12 : vector<64x128xi32>
    %cst = arith.constant dense<0.000000e+00> : vector<64x128xf32>
    %14 = tpu.matmul %0, %1, %cst {dimension_numbers = #tpu.dot_dimension_numbers<[1], [0], [0], [1], [0, 0, 1, 1], [], []>} : vector<64x16xf32>, vector<16x128xf32>, vector<64x128xf32> -> vector<64x128xf32>
    %15 = vector.broadcast %3 : vector<1x128xf32> to vector<64x128xf32>
    %16 = arith.addf %14, %15 : vector<64x128xf32>
    %cst_12 = arith.constant 0.000000e+00 : f32
    %17 = vector.broadcast %cst_12 : f32 to vector<64x128xf32>
    %18 = arith.select %13, %16, %17 : vector<64x128xi1>, vector<64x128xf32>
    %cst_13 = arith.constant dense<0.000000e+00> : vector<64xf32>
    %19 = vector.multi_reduction <add>, %18, %cst_13 [1] : vector<64x128xf32> to vector<64xf32>
    %20 = vector.shape_cast %19 : vector<64xf32> to vector<64x1xf32>
    %cst_14 = arith.constant 1.562500e-02 : f32
    %21 = vector.broadcast %cst_14 : f32 to vector<64x1xf32>
    %22 = arith.mulf %20, %21 : vector<64x1xf32>
    %23 = arith.mulf %18, %18 : vector<64x128xf32>
    %cst_15 = arith.constant dense<0.000000e+00> : vector<64xf32>
    %24 = vector.multi_reduction <add>, %23, %cst_15 [1] : vector<64x128xf32> to vector<64xf32>
    %25 = vector.shape_cast %24 : vector<64xf32> to vector<64x1xf32>
    %cst_16 = arith.constant 1.562500e-02 : f32
    %26 = vector.broadcast %cst_16 : f32 to vector<64x1xf32>
    %27 = arith.mulf %25, %26 : vector<64x1xf32>
    %28 = arith.mulf %22, %22 : vector<64x1xf32>
    %29 = arith.subf %27, %28 : vector<64x1xf32>
    %cst_17 = arith.constant 9.99999974E-6 : f32
    %30 = vector.broadcast %cst_17 : f32 to vector<64x1xf32>
    %31 = arith.addf %29, %30 : vector<64x1xf32>
    %32 = math.rsqrt %31 : vector<64x1xf32>
    %33 = vector.broadcast %22 : vector<64x1xf32> to vector<64x128xf32>
    %34 = arith.subf %16, %33 : vector<64x128xf32>
    %35 = vector.broadcast %32 : vector<64x1xf32> to vector<64x128xf32>
    %36 = arith.mulf %34, %35 : vector<64x128xf32>
    %37 = vector.broadcast %4 : vector<1x128xf32> to vector<64x128xf32>
    %38 = arith.mulf %36, %37 : vector<64x128xf32>
    %39 = vector.broadcast %5 : vector<1x128xf32> to vector<64x128xf32>
    %40 = arith.addf %38, %39 : vector<64x128xf32>
    %41 = arith.select %13, %40, %16 : vector<64x128xi1>, vector<64x128xf32>
    %cst_18 = arith.constant 0.000000e+00 : f32
    %42 = vector.broadcast %cst_18 : f32 to vector<64x128xf32>
    %43 = arith.maximumf %41, %42 : vector<64x128xf32>
    %cst_19 = arith.constant dense<0.000000e+00> : vector<64x128xf32>
    %44 = tpu.matmul %43, %2, %cst_19 {dimension_numbers = #tpu.dot_dimension_numbers<[1], [0], [0], [1], [0, 0, 1, 1], [], []>} : vector<64x128xf32>, vector<128x128xf32>, vector<64x128xf32> -> vector<64x128xf32>
    %45 = vector.broadcast %6 : vector<1x128xf32> to vector<64x128xf32>
    %46 = arith.addf %44, %45 : vector<64x128xf32>
    %cst_20 = arith.constant 0.000000e+00 : f32
    %47 = vector.broadcast %cst_20 : f32 to vector<64x128xf32>
    %48 = arith.select %13, %46, %47 : vector<64x128xi1>, vector<64x128xf32>
    %cst_21 = arith.constant dense<0.000000e+00> : vector<64xf32>
    %49 = vector.multi_reduction <add>, %48, %cst_21 [1] : vector<64x128xf32> to vector<64xf32>
    %50 = vector.shape_cast %49 : vector<64xf32> to vector<64x1xf32>
    %cst_22 = arith.constant 1.562500e-02 : f32
    %51 = vector.broadcast %cst_22 : f32 to vector<64x1xf32>
    %52 = arith.mulf %50, %51 : vector<64x1xf32>
    %53 = arith.mulf %48, %48 : vector<64x128xf32>
    %cst_23 = arith.constant dense<0.000000e+00> : vector<64xf32>
    %54 = vector.multi_reduction <add>, %53, %cst_23 [1] : vector<64x128xf32> to vector<64xf32>
    %55 = vector.shape_cast %54 : vector<64xf32> to vector<64x1xf32>
    %cst_24 = arith.constant 1.562500e-02 : f32
    %56 = vector.broadcast %cst_24 : f32 to vector<64x1xf32>
    %57 = arith.mulf %55, %56 : vector<64x1xf32>
    %58 = arith.mulf %52, %52 : vector<64x1xf32>
    %59 = arith.subf %57, %58 : vector<64x1xf32>
    %cst_25 = arith.constant 9.99999974E-6 : f32
    %60 = vector.broadcast %cst_25 : f32 to vector<64x1xf32>
    %61 = arith.addf %59, %60 : vector<64x1xf32>
    %62 = math.rsqrt %61 : vector<64x1xf32>
    %63 = vector.broadcast %52 : vector<64x1xf32> to vector<64x128xf32>
    %64 = arith.subf %46, %63 : vector<64x128xf32>
    %65 = vector.broadcast %62 : vector<64x1xf32> to vector<64x128xf32>
    %66 = arith.mulf %64, %65 : vector<64x128xf32>
    %67 = vector.broadcast %7 : vector<1x128xf32> to vector<64x128xf32>
    %68 = arith.mulf %66, %67 : vector<64x128xf32>
    %69 = vector.broadcast %8 : vector<1x128xf32> to vector<64x128xf32>
    %70 = arith.addf %68, %69 : vector<64x128xf32>
    %cst_26 = arith.constant 0.000000e+00 : f32
    %71 = vector.broadcast %cst_26 : f32 to vector<64x128xf32>
    %72 = arith.maximumf %70, %71 : vector<64x128xf32>
    %73 = arith.select %13, %72, %46 : vector<64x128xi1>, vector<64x128xf32>
    %cst_27 = arith.constant dense<0.000000e+00> : vector<8x64xf32>
    %74 = tpu.matmul %10, %73, %cst_27 {dimension_numbers = #tpu.dot_dimension_numbers<[1], [1], [0], [0], [0, 0, 1, 0], [], []>} : vector<8x128xf32>, vector<64x128xf32>, vector<8x64xf32> -> vector<8x64xf32>
    %75 = vector.extract_strided_slice %74 {offsets = [0, 0], sizes = [1, 64], strides = [1, 1]} : vector<8x64xf32> to vector<1x64xf32>
    %76 = vector.broadcast %9 : vector<1x1xf32> to vector<1x64xf32>
    %77 = arith.addf %75, %76 : vector<1x64xf32>
    %78 = arith.negf %77 : vector<1x64xf32>
    %79 = math.exp %78 : vector<1x64xf32>
    %cst_28 = arith.constant 1.000000e+00 : f32
    %80 = vector.broadcast %cst_28 : f32 to vector<1x64xf32>
    %81 = arith.addf %80, %79 : vector<1x64xf32>
    %82 = arith.divf %80, %81 : vector<1x64xf32>
    %cst_29 = arith.constant 1.000000e+02 : f32
    %83 = vector.broadcast %cst_29 : f32 to vector<1x64xf32>
    %84 = arith.mulf %82, %83 : vector<1x64xf32>
    %85 = tpu.iota {dimensions = array<i32: 0>} : vector<8x64xi32>
    %c0_i32 = arith.constant 0 : i32
    %86 = vector.broadcast %c0_i32 : i32 to vector<8x64xi32>
    %87 = arith.cmpi eq, %85, %86 : vector<8x64xi32>
    %88 = vector.shape_cast %84 : vector<1x64xf32> to vector<1x64xf32>
    %89 = vector.broadcast %88 : vector<1x64xf32> to vector<8x64xf32>
    %90 = arith.select %87, %89, %74 : vector<8x64xi1>, vector<8x64xf32>
    %c0_30 = arith.constant 0 : index
    %c0_31 = arith.constant 0 : index
    %91 = vector.load %arg3[%c0_30, %c0_31] : memref<8x64xf32, #tpu.memory_space<vmem>>, vector<8x64xf32>
    tpu.vector_store %arg3[%c0_30, %c0_31], %90 {strides = array<i32>} : memref<8x64xf32, #tpu.memory_space<vmem>>, vector<8x64xf32>,
    return
  }
  func.func @transform_0(%arg0: i32) -> (i32, i32) {
    %c0_i32 = arith.constant 0 : i32
    %c0_i32_0 = arith.constant 0 : i32
    return %arg0, %c0_i32 : i32, i32
  }
  func.func @transform_1(%arg0: i32) -> (i32, i32) {
    %c0_i32 = arith.constant 0 : i32
    %c0_i32_0 = arith.constant 0 : i32
    %c0_i32_1 = arith.constant 0 : i32
    return %c0_i32, %c0_i32_0 : i32, i32
  }
  func.func @transform_2(%arg0: i32) -> (i32, i32) {
    %c0_i32 = arith.constant 0 : i32
    %c0_i32_0 = arith.constant 0 : i32
    return %c0_i32, %arg0 : i32, i32
  }
}

</mosaic_0001>

<llo_original>
// kernel: security_nn_forward.1
$region0: #{security_nn_forward.1}
  #allocation0 [shape = 'u32[]', space=smem, size = 0x4, offset = 0x4, fixed_abs, tag = 'smem constant byte address 0x4 - core index']
  #allocation1 [shape = 'u32[72,128]{1,0:T(1,128)}', space=vmem, size = 0x9000, scoped, tag = 'internal scratch']
  %s0 = inlined_call_operand.vmem [shape: f32[64,16], index: 0, kind: input, shape index: {}]
  %s1 = inlined_call_operand.hbm [shape: f32[160,128], index: 1, kind: input, shape index: {}]
  %s2 = inlined_call_operand.vmem [shape: f32[8,64], index: 2, kind: output, shape index: {}]
  %s3 = sld [smem:[#allocation0]]
  $region22: #{security_nn_forward.1} parent=0
    _
  %s5 = ssub.s32 1, %s3
  %s6 = scalar_select 0, %s5, %s3
  $region1: #{security_nn_forward.1} parent=0
    #allocation2 [shape = 'u8[81920]{0}', space=vmem, size = 0x14000, scoped, tag = 'input window, operand 1, single buffered']
    #allocation3 [shape = 's32[1]{0}', space=sflag, size = 0x4, scoped, tag = 'scoped memory for security_nn_forward.1']
    %7 = vsyncpa [#allocation3], 0
    // Predicated region
    $region2: #{security_nn_forward.1} parent=1 // pred_check
      _
    $region3: #{security_nn_forward.1} parent=1 // pred_check_branch
      %9 = sbr.rel (0) target = $region5
    $region4: #{security_nn_forward.1} parent=1 // pred_region
      _
    $region5: #{security_nn_forward.1} parent=1 // pred_fallthru
      _
    // Predicated region
    $region6: #{security_nn_forward.1} parent=1 // pred_check
      _
    $region7: #{security_nn_forward.1} parent=1 // pred_check_branch
      %11 = sbr.rel (0) target = $region9
    $region8: #{security_nn_forward.1} parent=1 // pred_region
      %13 = vsyncadd [#allocation3], 0
      %s14 = sshll.u32 %s1, 4
      %s15 = int_to_ptr.hbm [resolvable:$true] %s14
      %s16 = sshll.u32 [#allocation2], 4
      %s17 = int_to_ptr.vmem [resolvable:$true] %s16
      %22 = dma.hbm_to_vmem [thread:$0]  %s15, 2560, %s17, [#allocation3], 128, 128, 8
    $region9: #{security_nn_forward.1} parent=1 // pred_fallthru
      _
    // Predicated region
    $region10: #{security_nn_forward.1} parent=1 // pred_check
      _
    $region11: #{security_nn_forward.1} parent=1 // pred_check_branch
      %24 = sbr.rel (0) target = $region13
    $region12: #{security_nn_forward.1} parent=1 // pred_region
      %26 = dma.done [#allocation3], 2560
    $region13: #{security_nn_forward.1} parent=1 // pred_fallthru
      _
    %v27 = vld [vmem:[%s0] sm:$0xff]
    %v28 = vld [vmem:[%s0 + $0x8] sm:$0xff]
    %v29 = vld [vmem:[%s0 + $0x10] sm:$0xff]
    %v30 = vld [vmem:[%s0 + $0x18] sm:$0xff]
    %v31 = vld [vmem:[%s0 + $0x20] sm:$0xff]
    %v32 = vld [vmem:[%s0 + $0x28] sm:$0xff]
    %v33 = vld [vmem:[%s0 + $0x30] sm:$0xff]
    %v34 = vld [vmem:[%s0 + $0x38] sm:$0xff]
    %v35 = vld [vmem:[#allocation2] sm:$0xff]
    %v36 = vld [vmem:[#allocation2 + $0x8] sm:$0xff]
    %v37 = vld [vmem:[#allocation2 + $0x10] sm:$0xff]
    %v38 = vld [vmem:[#allocation2 + $0x18] sm:$0xff]
    %v39 = vld [vmem:[#allocation2 + $0x20] sm:$0xff]
    %v40 = vld [vmem:[#allocation2 + $0x28] sm:$0xff]
    %v41 = vld [vmem:[#allocation2 + $0x30] sm:$0xff]
    %v42 = vld [vmem:[#allocation2 + $0x38] sm:$0xff]
    %v43 = vld [vmem:[#allocation2 + $0x40] sm:$0xff]
    %v44 = vld [vmem:[#allocation2 + $0x48] sm:$0xff]
    %v45 = vld [vmem:[#allocation2 + $0x50] sm:$0xff]
    %v46 = vld [vmem:[#allocation2 + $0x58] sm:$0xff]
    %v47 = vld [vmem:[#allocation2 + $0x60] sm:$0xff]
    %v48 = vld [vmem:[#allocation2 + $0x68] sm:$0xff]
    %v49 = vld [vmem:[#allocation2 + $0x70] sm:$0xff]
    %v50 = vld [vmem:[#allocation2 + $0x78] sm:$0xff]
    %v51 = vld [vmem:[#allocation2 + $0x80] sm:$0xff]
    %v52 = vld [vmem:[#allocation2 + $0x88] sm:$0xff]
    %v53 = vld [vmem:[#allocation2 + $0x90] sm:$0x1]
    %v54 = vld [vmem:[#allocation2 + $0x91] sm:$0x1]
    %v55 = vld [vmem:[#allocation2 + $0x92] sm:$0x1]
    %v56 = vld [vmem:[#allocation2 + $0x93] sm:$0x1]
    %v57 = vld [vmem:[#allocation2 + $0x94] sm:$0x1]
    %v58 = vld [vmem:[#allocation2 + $0x95] sm:$0x1]
    %v59 = vld [vmem:[#allocation2 + $0x96] sm:$0x1]
    %v60 = vld [vmem:[#allocation2 + $0x98] sm:$0xff]
    %v61 = vlaneseq
    %v62 = vand.u32 %v61, 127
    %vm63 = vcmp.lt.s32.totalorder %v62, 64
    %v64 = vperm.slane %v53, 0
    %vm65 = vcmask 130048
    %v67 = vsel %vm65, %v27, 0
    %v70 = vsel %vm65, %v28, 0
    %v73 = vsel %vm65, %v29, 0
    %v76 = vsel %vm65, %v30, 0
    %v79 = vsel %vm65, %v31, 0
    %v82 = vsel %vm65, %v32, 0
    %v85 = vsel %vm65, %v33, 0
    %v88 = vsel %vm65, %v34, 0
    %90 = vmatpush.msra.mxu0 0.0
    %91 = vmatpush.msra.mxu0 0.0
    %92 = vmatpush.msra.mxu0 0.0
    %93 = vmatpush.msra.mxu0 0.0
    %94 = vmatpush.msra.mxu0 0.0
    %95 = vmatpush.msra.mxu0 0.0
    %96 = vmatpush.msra.mxu0 0.0
    %97 = vmatpush.msra.mxu0 0.0
    %98 = vmatpush.msra.mxu0 0.0
    %99 = vmatpush.msra.mxu0 0.0
    %100 = vmatpush.msra.mxu0 0.0
    %101 = vmatpush.msra.mxu0 0.0
    %102 = vmatpush.msra.mxu0 0.0
    %103 = vmatpush.msra.mxu0 0.0
    %104 = vmatpush.msra.mxu0 %v36
    %105 = vmatpush.msra.mxu0 %v35
    %106 = vmatmul.f32.gmra.mxu0 %v67
    %v107 = vpop.f32.mrf.mxu0
    %v108 = vadd.f32 %v64, %v107
    %109 = vmatmul.f32.gmra.mxu0 %v70
    %v110 = vpop.f32.mrf.mxu0
    %v111 = vadd.f32 %v64, %v110
    %112 = vmatmul.f32.gmra.mxu0 %v73
    %v113 = vpop.f32.mrf.mxu0
    %v114 = vadd.f32 %v64, %v113
    %115 = vmatmul.f32.gmra.mxu0 %v76
    %v116 = vpop.f32.mrf.mxu0
    %v117 = vadd.f32 %v64, %v116
    %118 = vmatmul.f32.gmra.mxu0 %v79
    %v119 = vpop.f32.mrf.mxu0
    %v120 = vadd.f32 %v64, %v119
    %121 = vmatmul.f32.gmra.mxu0 %v82
    %v122 = vpop.f32.mrf.mxu0
    %v123 = vadd.f32 %v64, %v122
    %124 = vmatmul.f32.gmra.mxu0 %v85
    %v125 = vpop.f32.mrf.mxu0
    %v126 = vadd.f32 %v64, %v125
    %127 = vmatmul.f32.gmra.mxu0 %v88
    %v128 = vpop.f32.mrf.mxu0
    %v129 = vadd.f32 %v64, %v128
    %130 = vdwg.mxu0
    %v131 = vsel %vm63, %v108, 0.0
    %v132 = vsel %vm63, %v111, 0.0
    %v133 = vsel %vm63, %v114, 0.0
    %v134 = vsel %vm63, %v117, 0.0
    %v135 = vsel %vm63, %v120, 0.0
    %v136 = vsel %vm63, %v123, 0.0
    %v137 = vsel %vm63, %v126, 0.0
    %v138 = vsel %vm63, %v129, 0.0
    %139 = vadd.xlane.f32.xlu0 %v131
    %v140 = vpop.xlane.xlu0 %139
    %141 = vadd.xlane.f32.xlu0 %v132
    %v142 = vpop.xlane.xlu0 %141
    %143 = vadd.xlane.f32.xlu0 %v133
    %v144 = vpop.xlane.xlu0 %143
    %145 = vadd.xlane.f32.xlu0 %v134
    %v146 = vpop.xlane.xlu0 %145
    %147 = vadd.xlane.f32.xlu0 %v135
    %v148 = vpop.xlane.xlu0 %147
    %149 = vadd.xlane.f32.xlu0 %v136
    %v150 = vpop.xlane.xlu0 %149
    %151 = vadd.xlane.f32.xlu0 %v137
    %v152 = vpop.xlane.xlu0 %151
    %153 = vadd.xlane.f32.xlu0 %v138
    %v154 = vpop.xlane.xlu0 %153
    %v155 = vmul.f32 %v140, 0.015625
    %v156 = vmul.f32 %v142, 0.015625
    %v157 = vmul.f32 %v144, 0.015625
    %v158 = vmul.f32 %v146, 0.015625
    %v159 = vmul.f32 %v148, 0.015625
    %v160 = vmul.f32 %v150, 0.015625
    %v161 = vmul.f32 %v152, 0.015625
    %v162 = vmul.f32 %v154, 0.015625
    %v163 = vmul.f32 %v131, %v131
    %v164 = vmul.f32 %v132, %v132
    %v165 = vmul.f32 %v133, %v133
    %v166 = vmul.f32 %v134, %v134
    %v167 = vmul.f32 %v135, %v135
    %v168 = vmul.f32 %v136, %v136
    %v169 = vmul.f32 %v137, %v137
    %v170 = vmul.f32 %v138, %v138
    %171 = vadd.xlane.f32.xlu0 %v163
    %v172 = vpop.xlane.xlu0 %171
    %173 = vadd.xlane.f32.xlu0 %v164
    %v174 = vpop.xlane.xlu0 %173
    %175 = vadd.xlane.f32.xlu0 %v165
    %v176 = vpop.xlane.xlu0 %175
    %177 = vadd.xlane.f32.xlu0 %v166
    %v178 = vpop.xlane.xlu0 %177
    %179 = vadd.xlane.f32.xlu0 %v167
    %v180 = vpop.xlane.xlu0 %179
    %181 = vadd.xlane.f32.xlu0 %v168
    %v182 = vpop.xlane.xlu0 %181
    %183 = vadd.xlane.f32.xlu0 %v169
    %v184 = vpop.xlane.xlu0 %183
    %185 = vadd.xlane.f32.xlu0 %v170
    %v186 = vpop.xlane.xlu0 %185
    %v187 = vmul.f32 %v172, 0.015625
    %v188 = vmul.f32 %v174, 0.015625
    %v189 = vmul.f32 %v176, 0.015625
    %v190 = vmul.f32 %v178, 0.015625
    %v191 = vmul.f32 %v180, 0.015625
    %v192 = vmul.f32 %v182, 0.015625
    %v193 = vmul.f32 %v184, 0.015625
    %v194 = vmul.f32 %v186, 0.015625
    %v195 = vmul.f32 %v155, %v155
    %v196 = vmul.f32 %v156, %v156
    %v197 = vmul.f32 %v157, %v157
    %v198 = vmul.f32 %v158, %v158
    %v199 = vmul.f32 %v159, %v159
    %v200 = vmul.f32 %v160, %v160
    %v201 = vmul.f32 %v161, %v161
    %v202 = vmul.f32 %v162, %v162
    %v203 = vsub.f32 %v187, %v195
    %v204 = vsub.f32 %v188, %v196
    %v205 = vsub.f32 %v189, %v197
    %v206 = vsub.f32 %v190, %v198
    %v207 = vsub.f32 %v191, %v199
    %v208 = vsub.f32 %v192, %v200
    %v209 = vsub.f32 %v193, %v201
    %v210 = vsub.f32 %v194, %v202
    %v211 = vadd.f32 %v203, 1e-05
    %v212 = vadd.f32 %v204, 1e-05
    %v213 = vadd.f32 %v205, 1e-05
    %v214 = vadd.f32 %v206, 1e-05
    %v215 = vadd.f32 %v207, 1e-05
    %v216 = vadd.f32 %v208, 1e-05
    %v217 = vadd.f32 %v209, 1e-05
    %v218 = vadd.f32 %v210, 1e-05
    %v219 = vrsqrt.pop %v211
    %v220 = vmul.f32 %v219, %v211
    %v221 = vmul.f32 %v220, %v219
    %v222 = vmul.f32 0.5, %v221
    %v223 = vsub.f32 1.5, %v222
    %v224 = vmul.f32 %v219, %v223
    %vm225 = vweird.f32 %v211
    %vm226 = vweird.f32 %v219
    %vm227 = vmor %vm225, %vm226
    %v228 = vsel %vm227, %v219, %v224
    %v229 = vrsqrt.pop %v212
    %v230 = vmul.f32 %v229, %v212
    %v231 = vmul.f32 %v230, %v229
    %v232 = vmul.f32 0.5, %v231
    %v233 = vsub.f32 1.5, %v232
    %v234 = vmul.f32 %v229, %v233
    %vm235 = vweird.f32 %v212
    %vm236 = vweird.f32 %v229
    %vm237 = vmor %vm235, %vm236
    %v238 = vsel %vm237, %v229, %v234
    %v239 = vrsqrt.pop %v213
    %v240 = vmul.f32 %v239, %v213
    %v241 = vmul.f32 %v240, %v239
    %v242 = vmul.f32 0.5, %v241
    %v243 = vsub.f32 1.5, %v242
    %v244 = vmul.f32 %v239, %v243
    %vm245 = vweird.f32 %v213
    %vm246 = vweird.f32 %v239
    %vm247 = vmor %vm245, %vm246
    %v248 = vsel %vm247, %v239, %v244
    %v249 = vrsqrt.pop %v214
    %v250 = vmul.f32 %v249, %v214
    %v251 = vmul.f32 %v250, %v249
    %v252 = vmul.f32 0.5, %v251
    %v253 = vsub.f32 1.5, %v252
    %v254 = vmul.f32 %v249, %v253
    %vm255 = vweird.f32 %v214
    %vm256 = vweird.f32 %v249
    %vm257 = vmor %vm255, %vm256
    %v258 = vsel %vm257, %v249, %v254
    %v259 = vrsqrt.pop %v215
    %v260 = vmul.f32 %v259, %v215
    %v261 = vmul.f32 %v260, %v259
    %v262 = vmul.f32 0.5, %v261
    %v263 = vsub.f32 1.5, %v262
    %v264 = vmul.f32 %v259, %v263
    %vm265 = vweird.f32 %v215
    %vm266 = vweird.f32 %v259
    %vm267 = vmor %vm265, %vm266
    %v268 = vsel %vm267, %v259, %v264
    %v269 = vrsqrt.pop %v216
    %v270 = vmul.f32 %v269, %v216
    %v271 = vmul.f32 %v270, %v269
    %v272 = vmul.f32 0.5, %v271
    %v273 = vsub.f32 1.5, %v272
    %v274 = vmul.f32 %v269, %v273
    %vm275 = vweird.f32 %v216
    %vm276 = vweird.f32 %v269
    %vm277 = vmor %vm275, %vm276
    %v278 = vsel %vm277, %v269, %v274
    %v279 = vrsqrt.pop %v217
    %v280 = vmul.f32 %v279, %v217
    %v281 = vmul.f32 %v280, %v279
    %v282 = vmul.f32 0.5, %v281
    %v283 = vsub.f32 1.5, %v282
    %v284 = vmul.f32 %v279, %v283
    %vm285 = vweird.f32 %v217
    %vm286 = vweird.f32 %v279
    %vm287 = vmor %vm285, %vm286
    %v288 = vsel %vm287, %v279, %v284
    %v289 = vrsqrt.pop %v218
    %v290 = vmul.f32 %v289, %v218
    %v291 = vmul.f32 %v290, %v289
    %v292 = vmul.f32 0.5, %v291
    %v293 = vsub.f32 1.5, %v292
    %v294 = vmul.f32 %v289, %v293
    %vm295 = vweird.f32 %v218
    %vm296 = vweird.f32 %v289
    %vm297 = vmor %vm295, %vm296
    %v298 = vsel %vm297, %v289, %v294
    %v299 = vsub.f32 %v108, %v155
    %v300 = vsub.f32 %v111, %v156
    %v301 = vsub.f32 %v114, %v157
    %v302 = vsub.f32 %v117, %v158
    %v303 = vsub.f32 %v120, %v159
    %v304 = vsub.f32 %v123, %v160
    %v305 = vsub.f32 %v126, %v161
    %v306 = vsub.f32 %v129, %v162
    %v307 = vmul.f32 %v299, %v228
    %v308 = vmul.f32 %v300, %v238
    %v309 = vmul.f32 %v301, %v248
    %v310 = vmul.f32 %v302, %v258
    %v311 = vmul.f32 %v303, %v268
    %v312 = vmul.f32 %v304, %v278
    %v313 = vmul.f32 %v305, %v288
    %v314 = vmul.f32 %v306, %v298
    %v315 = vperm.slane %v54, 0
    %v316 = vmul.f32 %v307, %v315
    %v317 = vmul.f32 %v308, %v315
    %v318 = vmul.f32 %v309, %v315
    %v319 = vmul.f32 %v310, %v315
    %v320 = vmul.f32 %v311, %v315
    %v321 = vmul.f32 %v312, %v315
    %v322 = vmul.f32 %v313, %v315
    %v323 = vmul.f32 %v314, %v315
    %v324 = vperm.slane %v55, 0
    %v325 = vadd.f32 %v316, %v324
    %v326 = vadd.f32 %v317, %v324
    %v327 = vadd.f32 %v318, %v324
    %v328 = vadd.f32 %v319, %v324
    %v329 = vadd.f32 %v320, %v324
    %v330 = vadd.f32 %v321, %v324
    %v331 = vadd.f32 %v322, %v324
    %v332 = vadd.f32 %v323, %v324
    %v333 = vsel %vm63, %v325, %v108
    %v334 = vsel %vm63, %v326, %v111
    %v335 = vsel %vm63, %v327, %v114
    %v336 = vsel %vm63, %v328, %v117
    %v337 = vsel %vm63, %v329, %v120
    %v338 = vsel %vm63, %v330, %v123
    %v339 = vsel %vm63, %v331, %v126
    %v340 = vsel %vm63, %v332, %v129
    %v341 = vmax.f32 %v333, 0.0
    %v342 = vmax.f32 %v334, 0.0
    %v343 = vmax.f32 %v335, 0.0
    %v344 = vmax.f32 %v336, 0.0
    %v345 = vmax.f32 %v337, 0.0
    %v346 = vmax.f32 %v338, 0.0
    %v347 = vmax.f32 %v339, 0.0
    %v348 = vmax.f32 %v340, 0.0
    %v349 = vperm.slane %v56, 0
    %350 = vmatpush.msra.mxu0 %v52
    %351 = vmatpush.msra.mxu0 %v51
    %352 = vmatpush.msra.mxu0 %v50
    %353 = vmatpush.msra.mxu0 %v49
    %354 = vmatpush.msra.mxu0 %v48
    %355 = vmatpush.msra.mxu0 %v47
    %356 = vmatpush.msra.mxu0 %v46
    %357 = vmatpush.msra.mxu0 %v45
    %358 = vmatpush.msra.mxu0 %v44
    %359 = vmatpush.msra.mxu0 %v43
    %360 = vmatpush.msra.mxu0 %v42
    %361 = vmatpush.msra.mxu0 %v41
    %362 = vmatpush.msra.mxu0 %v40
    %363 = vmatpush.msra.mxu0 %v39
    %364 = vmatpush.msra.mxu0 %v38
    %365 = vmatpush.msra.mxu0 %v37
    %366 = vmatmul.f32.gmra.mxu0 %v341
    %v367 = vpop.f32.mrf.mxu0
    %v368 = vadd.f32 %v349, %v367
    %369 = vmatmul.f32.gmra.mxu0 %v342
    %v370 = vpop.f32.mrf.mxu0
    %v371 = vadd.f32 %v349, %v370
    %372 = vmatmul.f32.gmra.mxu0 %v343
    %v373 = vpop.f32.mrf.mxu0
    %v374 = vadd.f32 %v349, %v373
    %375 = vmatmul.f32.gmra.mxu0 %v344
    %v376 = vpop.f32.mrf.mxu0
    %v377 = vadd.f32 %v349, %v376
    %378 = vmatmul.f32.gmra.mxu0 %v345
    %v379 = vpop.f32.mrf.mxu0
    %v380 = vadd.f32 %v349, %v379
    %381 = vmatmul.f32.gmra.mxu0 %v346
    %v382 = vpop.f32.mrf.mxu0
    %v383 = vadd.f32 %v349, %v382
    %384 = vmatmul.f32.gmra.mxu0 %v347
    %v385 = vpop.f32.mrf.mxu0
    %v386 = vadd.f32 %v349, %v385
    %387 = vmatmul.f32.gmra.mxu0 %v348
    %v388 = vpop.f32.mrf.mxu0
    %v389 = vadd.f32 %v349, %v388
    %390 = vdwg.mxu0
    %v391 = vsel %vm63, %v368, 0.0
    %v392 = vsel %vm63, %v371, 0.0
    %v393 = vsel %vm63, %v374, 0.0
    %v394 = vsel %vm63, %v377, 0.0
    %v395 = vsel %vm63, %v380, 0.0
    %v396 = vsel %vm63, %v383, 0.0
    %v397 = vsel %vm63, %v386, 0.0
    %v398 = vsel %vm63, %v389, 0.0
    %399 = vadd.xlane.f32.xlu0 %v391
    %v400 = vpop.xlane.xlu0 %399
    %401 = vadd.xlane.f32.xlu0 %v392
    %v402 = vpop.xlane.xlu0 %401
    %403 = vadd.xlane.f32.xlu0 %v393
    %v404 = vpop.xlane.xlu0 %403
    %405 = vadd.xlane.f32.xlu0 %v394
    %v406 = vpop.xlane.xlu0 %405
    %407 = vadd.xlane.f32.xlu0 %v395
    %v408 = vpop.xlane.xlu0 %407
    %409 = vadd.xlane.f32.xlu0 %v396
    %v410 = vpop.xlane.xlu0 %409
    %411 = vadd.xlane.f32.xlu0 %v397
    %v412 = vpop.xlane.xlu0 %411
    %413 = vadd.xlane.f32.xlu0 %v398
    %v414 = vpop.xlane.xlu0 %413
    %v415 = vmul.f32 %v400, 0.015625
    %v416 = vmul.f32 %v402, 0.015625
    %v417 = vmul.f32 %v404, 0.015625
    %v418 = vmul.f32 %v406, 0.015625
    %v419 = vmul.f32 %v408, 0.015625
    %v420 = vmul.f32 %v410, 0.015625
    %v421 = vmul.f32 %v412, 0.015625
    %v422 = vmul.f32 %v414, 0.015625
    %v423 = vmul.f32 %v391, %v391
    %v424 = vmul.f32 %v392, %v392
    %v425 = vmul.f32 %v393, %v393
    %v426 = vmul.f32 %v394, %v394
    %v427 = vmul.f32 %v395, %v395
    %v428 = vmul.f32 %v396, %v396
    %v429 = vmul.f32 %v397, %v397
    %v430 = vmul.f32 %v398, %v398
    %431 = vadd.xlane.f32.xlu0 %v423
    %v432 = vpop.xlane.xlu0 %431
    %433 = vadd.xlane.f32.xlu0 %v424
    %v434 = vpop.xlane.xlu0 %433
    %435 = vadd.xlane.f32.xlu0 %v425
    %v436 = vpop.xlane.xlu0 %435
    %437 = vadd.xlane.f32.xlu0 %v426
    %v438 = vpop.xlane.xlu0 %437
    %439 = vadd.xlane.f32.xlu0 %v427
    %v440 = vpop.xlane.xlu0 %439
    %441 = vadd.xlane.f32.xlu0 %v428
    %v442 = vpop.xlane.xlu0 %441
    %443 = vadd.xlane.f32.xlu0 %v429
    %v444 = vpop.xlane.xlu0 %443
    %445 = vadd.xlane.f32.xlu0 %v430
    %v446 = vpop.xlane.xlu0 %445
    %v447 = vmul.f32 %v432, 0.015625
    %v448 = vmul.f32 %v434, 0.015625
    %v449 = vmul.f32 %v436, 0.015625
    %v450 = vmul.f32 %v438, 0.015625
    %v451 = vmul.f32 %v440, 0.015625
    %v452 = vmul.f32 %v442, 0.015625
    %v453 = vmul.f32 %v444, 0.015625
    %v454 = vmul.f32 %v446, 0.015625
    %v455 = vmul.f32 %v415, %v415
    %v456 = vmul.f32 %v416, %v416
    %v457 = vmul.f32 %v417, %v417
    %v458 = vmul.f32 %v418, %v418
    %v459 = vmul.f32 %v419, %v419
    %v460 = vmul.f32 %v420, %v420
    %v461 = vmul.f32 %v421, %v421
    %v462 = vmul.f32 %v422, %v422
    %v463 = vsub.f32 %v447, %v455
    %v464 = vsub.f32 %v448, %v456
    %v465 = vsub.f32 %v449, %v457
    %v466 = vsub.f32 %v450, %v458
    %v467 = vsub.f32 %v451, %v459
    %v468 = vsub.f32 %v452, %v460
    %v469 = vsub.f32 %v453, %v461
    %v470 = vsub.f32 %v454, %v462
    %v471 = vadd.f32 %v463, 1e-05
    %v472 = vadd.f32 %v464, 1e-05
    %v473 = vadd.f32 %v465, 1e-05
    %v474 = vadd.f32 %v466, 1e-05
    %v475 = vadd.f32 %v467, 1e-05
    %v476 = vadd.f32 %v468, 1e-05
    %v477 = vadd.f32 %v469, 1e-05
    %v478 = vadd.f32 %v470, 1e-05
    %v479 = vrsqrt.pop %v471
    %v480 = vmul.f32 %v479, %v471
    %v481 = vmul.f32 %v480, %v479
    %v482 = vmul.f32 0.5, %v481
    %v483 = vsub.f32 1.5, %v482
    %v484 = vmul.f32 %v479, %v483
    %vm485 = vweird.f32 %v471
    %vm486 = vweird.f32 %v479
    %vm487 = vmor %vm485, %vm486
    %v488 = vsel %vm487, %v479, %v484
    %v489 = vrsqrt.pop %v472
    %v490 = vmul.f32 %v489, %v472
    %v491 = vmul.f32 %v490, %v489
    %v492 = vmul.f32 0.5, %v491
    %v493 = vsub.f32 1.5, %v492
    %v494 = vmul.f32 %v489, %v493
    %vm495 = vweird.f32 %v472
    %vm496 = vweird.f32 %v489
    %vm497 = vmor %vm495, %vm496
    %v498 = vsel %vm497, %v489, %v494
    %v499 = vrsqrt.pop %v473
    %v500 = vmul.f32 %v499, %v473
    %v501 = vmul.f32 %v500, %v499
    %v502 = vmul.f32 0.5, %v501
    %v503 = vsub.f32 1.5, %v502
    %v504 = vmul.f32 %v499, %v503
    %vm505 = vweird.f32 %v473
    %vm506 = vweird.f32 %v499
    %vm507 = vmor %vm505, %vm506
    %v508 = vsel %vm507, %v499, %v504
    %v509 = vrsqrt.pop %v474
    %v510 = vmul.f32 %v509, %v474
    %v511 = vmul.f32 %v510, %v509
    %v512 = vmul.f32 0.5, %v511
    %v513 = vsub.f32 1.5, %v512
    %v514 = vmul.f32 %v509, %v513
    %vm515 = vweird.f32 %v474
    %vm516 = vweird.f32 %v509
    %vm517 = vmor %vm515, %vm516
    %v518 = vsel %vm517, %v509, %v514
    %v519 = vrsqrt.pop %v475
    %v520 = vmul.f32 %v519, %v475
    %v521 = vmul.f32 %v520, %v519
    %v522 = vmul.f32 0.5, %v521
    %v523 = vsub.f32 1.5, %v522
    %v524 = vmul.f32 %v519, %v523
    %vm525 = vweird.f32 %v475
    %vm526 = vweird.f32 %v519
    %vm527 = vmor %vm525, %vm526
    %v528 = vsel %vm527, %v519, %v524
    %v529 = vrsqrt.pop %v476
    %v530 = vmul.f32 %v529, %v476
    %v531 = vmul.f32 %v530, %v529
    %v532 = vmul.f32 0.5, %v531
    %v533 = vsub.f32 1.5, %v532
    %v534 = vmul.f32 %v529, %v533
    %vm535 = vweird.f32 %v476
    %vm536 = vweird.f32 %v529
    %vm537 = vmor %vm535, %vm536
    %v538 = vsel %vm537, %v529, %v534
    %v539 = vrsqrt.pop %v477
    %v540 = vmul.f32 %v539, %v477
    %v541 = vmul.f32 %v540, %v539
    %v542 = vmul.f32 0.5, %v541
    %v543 = vsub.f32 1.5, %v542
    %v544 = vmul.f32 %v539, %v543
    %vm545 = vweird.f32 %v477
    %vm546 = vweird.f32 %v539
    %vm547 = vmor %vm545, %vm546
    %v548 = vsel %vm547, %v539, %v544
    %v549 = vrsqrt.pop %v478
    %v550 = vmul.f32 %v549, %v478
    %v551 = vmul.f32 %v550, %v549
    %v552 = vmul.f32 0.5, %v551
    %v553 = vsub.f32 1.5, %v552
    %v554 = vmul.f32 %v549, %v553
    %vm555 = vweird.f32 %v478
    %vm556 = vweird.f32 %v549
    %vm557 = vmor %vm555, %vm556
    %v558 = vsel %vm557, %v549, %v554
    %v559 = vsub.f32 %v368, %v415
    %v560 = vsub.f32 %v371, %v416
    %v561 = vsub.f32 %v374, %v417
    %v562 = vsub.f32 %v377, %v418
    %v563 = vsub.f32 %v380, %v419
    %v564 = vsub.f32 %v383, %v420
    %v565 = vsub.f32 %v386, %v421
    %v566 = vsub.f32 %v389, %v422
    %v567 = vmul.f32 %v559, %v488
    %v568 = vmul.f32 %v560, %v498
    %v569 = vmul.f32 %v561, %v508
    %v570 = vmul.f32 %v562, %v518
    %v571 = vmul.f32 %v563, %v528
    %v572 = vmul.f32 %v564, %v538
    %v573 = vmul.f32 %v565, %v548
    %v574 = vmul.f32 %v566, %v558
    %v575 = vperm.slane %v57, 0
    %v576 = vmul.f32 %v567, %v575
    %v577 = vmul.f32 %v568, %v575
    %v578 = vmul.f32 %v569, %v575
    %v579 = vmul.f32 %v570, %v575
    %v580 = vmul.f32 %v571, %v575
    %v581 = vmul.f32 %v572, %v575
    %v582 = vmul.f32 %v573, %v575
    %v583 = vmul.f32 %v574, %v575
    %v584 = vperm.slane %v58, 0
    %v585 = vadd.f32 %v576, %v584
    %v586 = vadd.f32 %v577, %v584
    %v587 = vadd.f32 %v578, %v584
    %v588 = vadd.f32 %v579, %v584
    %v589 = vadd.f32 %v580, %v584
    %v590 = vadd.f32 %v581, %v584
    %v591 = vadd.f32 %v582, %v584
    %v592 = vadd.f32 %v583, %v584
    %v593 = vmax.f32 %v585, 0.0
    %v594 = vmax.f32 %v586, 0.0
    %v595 = vmax.f32 %v587, 0.0
    %v596 = vmax.f32 %v588, 0.0
    %v597 = vmax.f32 %v589, 0.0
    %v598 = vmax.f32 %v590, 0.0
    %v599 = vmax.f32 %v591, 0.0
    %v600 = vmax.f32 %v592, 0.0
    %v601 = vsel %vm63, %v593, %v368
    %v602 = vsel %vm63, %v594, %v371
    %v603 = vsel %vm63, %v595, %v374
    %v604 = vsel %vm63, %v596, %v377
    %v605 = vsel %vm63, %v597, %v380
    %v606 = vsel %vm63, %v598, %v383
    %v607 = vsel %vm63, %v599, %v386
    %v608 = vsel %vm63, %v600, %v389
    %609 = vmatpush.xpose.msra.mxu0 0.0
    %610 = vmatpush.xpose.msra.mxu0 0.0
    %611 = vmatpush.xpose.msra.mxu0 0.0
    %612 = vmatpush.xpose.msra.mxu0 0.0
    %613 = vmatpush.xpose.msra.mxu0 0.0
    %614 = vmatpush.xpose.msra.mxu0 0.0
    %615 = vmatpush.xpose.msra.mxu0 0.0
    %616 = vmatpush.xpose.msra.mxu0 0.0
    %617 = vmatpush.xpose.msra.mxu0 %v608
    %618 = vmatpush.xpose.msra.mxu0 %v607
    %619 = vmatpush.xpose.msra.mxu0 %v606
    %620 = vmatpush.xpose.msra.mxu0 %v605
    %621 = vmatpush.xpose.msra.mxu0 %v604
    %622 = vmatpush.xpose.msra.mxu0 %v603
    %623 = vmatpush.xpose.msra.mxu0 %v602
    %624 = vmatpush.xpose.msra.mxu0 %v601
    %625 = vmatmul.f32.gmra.mxu0 %v60
    %v626 = vpop.f32.mrf.mxu0
    %v627 = vadd.f32 0.0, %v626
    %628 = vdwg.mxu0
    %630 = vset.pattern.permute.xlu0 0
    %631 = vperm.xlu0 %630, %v59
    %v632 = vpop.permute.xlu0 %631
    %v634 = vadd.f32 %v627, %v632
    %v635 = vxor.u32 %v634, 2147483648
    %v636 = vmul.f32 %v635, 1.442695
    %v637 = vpow.pop %v636
    %v638 = vadd.f32 %v637, 1.0
    %v639 = vrcp.pop %v638
    %v640 = vmul.f32 %v638, %v639
    %v641 = vsub.f32 1.0, %v640
    %v642 = vmul.f32 %v639, %v641
    %v643 = vadd.f32 %v639, %v642
    %vm644 = vweird.f32 %v638
    %vm645 = vweird.f32 %v639
    %vm646 = vmor %vm644, %vm645
    %v647 = vsel %vm646, %v639, %v643
    %v648 = vand.u32 2147483647, %v638
    %vm649 = vcmp.eq.f32.partialorder %v648, 8.507059e+37
    %v650 = vand.u32 %v638, 2147483648
    %v651 = vor.u32 1.1754944e-38, %v650
    %v652 = vsel %vm649, %v651, %v647
    %v653 = vmul.f32 1.0, %v652
    %v654 = vmul.f32 %v653, 100.0
    %v655 = vlaneseq
    %v656 = vshrl.u32 %v655, 7
    %vm657 = vcmp.eq.s32.totalorder %v656, 0
    %v658 = vperm.slane %v654, 0
    %v659 = vsel %vm657, %v658, %v627
    %vm660 = vcmask 523264
    %661 = vst.msk [vmem:[%s2] sm:$0xff] %vm660, %v659
    // Predicated region
    $region14: #{security_nn_forward.1} parent=1 // pred_check
      _
    $region15: #{security_nn_forward.1} parent=1 // pred_check_branch
      %663 = sbr.rel (0) target = $region17
    $region16: #{security_nn_forward.1} parent=1 // pred_region
      _
    $region17: #{security_nn_forward.1} parent=1 // pred_fallthru
      _
    // Predicated region
    $region18: #{security_nn_forward.1} parent=1 // pred_check
      _
    $region19: #{security_nn_forward.1} parent=1 // pred_check_branch
      %665 = sbr.rel (0) target = $region21
    $region20: #{security_nn_forward.1} parent=1 // pred_region
      _
    $region21: #{security_nn_forward.1} parent=1 // pred_fallthru
      _
    %666 = vsyncpa [#allocation3], 1

</llo_original>
